<compile_context>
chip_gen: v7x
topology: tpu7x:2x2x1
jax: 0.10.0
libtpu: 0.0.40
codegen_flags: <defaults>
</compile_context>

<pallas_src>
import jax
import jax.numpy as jnp
from jax.experimental import pallas as pl
from jax.experimental.pallas import tpu as pltpu


def _round_up(x, m):
    return (x + m - 1) // m * m


# ----------------------------------------------------------------------------
# Kernel 1: fused im2col-conv matmul (pixel-pair packed) + folded-BN shift + ReLU
# ----------------------------------------------------------------------------
def _conv_bn_relu_kernel(p_ref, w_ref, shift_ref, o_ref):
    # p_ref:     (tm, 2K)  bf16 patches, two output pixels packed per row
    # w_ref:     (2K, 2C)  bf16 block-diagonal weights (BN scale pre-folded)
    # shift_ref: (1, 2C)   f32 folded BN shift (duplicated for both pixels)
    # o_ref:     (tm, 2C)  f32, lane-dense (2C = 128 for Cout = 64)
    acc = jnp.dot(p_ref[...], w_ref[...], preferred_element_type=jnp.float32)
    o_ref[...] = jnp.maximum(acc + shift_ref[...], 0.0)


def _conv_bn_relu(patches, wblk, shift2, *, tm_target=512):
    M, K = patches.shape              # K = KH*KW*Cin
    K2, C2 = wblk.shape               # (2K, 2*Cout)
    mp2_raw = pl.cdiv(M, 2)
    tm = min(tm_target, _round_up(mp2_raw, 8))
    mp2 = _round_up(mp2_raw, tm)
    m_pad = 2 * mp2
    if m_pad != M:
        patches = jnp.pad(patches, ((0, m_pad - M), (0, 0)))
    patches2 = patches.reshape(mp2, 2 * K)   # free: packs adjacent pixel pairs

    out = pl.pallas_call(
        _conv_bn_relu_kernel,
        out_shape=jax.ShapeDtypeStruct((mp2, C2), jnp.float32),
        grid=(mp2 // tm,),
        in_specs=[
            pl.BlockSpec((tm, 2 * K), lambda i: (i, 0)),
            pl.BlockSpec((K2, C2), lambda i: (0, 0)),
            pl.BlockSpec((1, C2), lambda i: (0, 0)),
        ],
        out_specs=pl.BlockSpec((tm, C2), lambda i: (i, 0)),
        compiler_params=pltpu.CompilerParams(
            dimension_semantics=("parallel",)),
    )(patches2, wblk, shift2)
    # (mp2, 2C) row-major == (m_pad, C) row-major -> free reshape, then drop pad rows.
    return out.reshape(m_pad, C2 // 2)[:M]


# ----------------------------------------------------------------------------
# Kernel 2: tiled 3x3 / stride-2 / pad-1 max-pool reading the conv output directly
# ----------------------------------------------------------------------------
def _maxpool_kernel(a_ref, b_ref, o_ref):
    # a_ref: (1, 2*tr, W2+1, 2C)  padded rows 2r, 2r+1 for tr pooled rows
    # b_ref: (1, 1,    W2+1, 2C)  padded row 2*tr (first row after this block)
    # o_ref: (1, tr,   W2,   C)
    _, tr, w2, c = o_ref.shape
    a = a_ref[0].reshape(tr, 2, w2 + 1, 2 * c)
    r0 = a[:, 0]                                   # padded rows 2r
    r1 = a[:, 1]                                   # padded rows 2r+1
    if tr > 1:
        r2 = jnp.concatenate([r0[1:], b_ref[0]], axis=0)   # padded rows 2r+2
    else:
        r2 = b_ref[0]
    h = jnp.maximum(jnp.maximum(r0, r1), r2)       # (tr, W2+1, 2C) row-max
    # adjacent W columns are packed into the lane dim: [0:C] = col 2c, [C:2C] = col 2c+1
    w0 = h[:, :w2, :c]                             # col 2c
    w1 = h[:, :w2, c:]                             # col 2c+1
    w2t = h[:, 1:, :c]                             # col 2c+2
    o_ref[0] = jnp.maximum(jnp.maximum(w0, w1), w2t)


def _maxpool_3x3_s2(y, *, tr_target=16):
    # y: (N, H1, W1, C) f32, post-ReLU (>= 0) -> zero padding is exact for max.
    N, H1, W1, C = y.shape
    H2 = (H1 - 1) // 2 + 1
    W2 = (W1 - 1) // 2 + 1
    tr = min(tr_target, H2)
    nblk = pl.cdiv(H2, tr)
    H2p = nblk * tr
    Hp = max(H1 + 2, 2 * H2p + 1)
    Wp = 2 * W2 + 2
    yp = jnp.pad(y, ((0, 0), (1, Hp - 1 - H1), (1, Wp - 1 - W1), (0, 0)))
    # pack adjacent W columns into lanes -> (N, Hp, W2+1, 2C); free HBM reshape.
    ypk = yp.reshape(N, Hp, W2 + 1, 2 * C)

    out = pl.pallas_call(
        _maxpool_kernel,
        out_shape=jax.ShapeDtypeStruct((N, H2p, W2, C), jnp.float32),
        grid=(N, nblk),
        in_specs=[
            pl.BlockSpec((1, 2 * tr, W2 + 1, 2 * C),
                         lambda n, i: (n, i, 0, 0)),
            # same array again, 1-row blocks: supplies padded row 2*tr*(i+1)
            pl.BlockSpec((1, 1, W2 + 1, 2 * C),
                         lambda n, i: (n, 2 * tr * (i + 1), 0, 0)),
        ],
        out_specs=pl.BlockSpec((1, tr, W2, C), lambda n, i: (n, i, 0, 0)),
        compiler_params=pltpu.CompilerParams(
            dimension_semantics=("parallel", "parallel")),
    )(ypk, ypk)
    return out[:, :H2]


# ----------------------------------------------------------------------------
# Wrapper: im2col / folding glue in plain JAX, compute in Pallas
# ----------------------------------------------------------------------------
@jax.jit
def imagenet_stem(x_nchw, conv_w, conv_b, gamma, beta, run_mean, run_var,
                  eps=1e-5):
    N, Cin, H, W = x_nchw.shape
    Cout, _, KH, KW = conv_w.shape        # (64, Cin, 7, 7)
    stride, pad = 2, 3
    H1 = (H + 2 * pad - KH) // stride + 1
    W1 = (W + 2 * pad - KW) // stride + 1
    K = KH * KW * Cin

    # ---- im2col (NHWC), patch ordering (kh, kw, c); bf16 MXU operands ----
    x = jnp.transpose(x_nchw, (0, 2, 3, 1)).astype(jnp.float32)   # NHWC
    xp = jnp.pad(x, ((0, 0), (pad, pad), (pad, pad), (0, 0)))
    taps = []
    for kh in range(KH):
        for kw in range(KW):
            taps.append(
                xp[:, kh:kh + stride * (H1 - 1) + 1:stride,
                      kw:kw + stride * (W1 - 1) + 1:stride, :])
    patches = jnp.stack(taps, axis=3).reshape(N * H1 * W1, K)
    patches = patches.astype(jnp.bfloat16)

    # ---- fold conv bias + eval-mode BN: scale into weights, shift into epilogue ----
    scale = gamma / jnp.sqrt(run_var + eps)                        # (Cout,)
    shift = scale * (conv_b - run_mean) + beta                     # (Cout,)
    w2d = jnp.transpose(conv_w, (2, 3, 1, 0)).reshape(K, Cout)
    w2d = (w2d * scale[None, :]).astype(jnp.float32)
    # block-diagonal weights -> two output pixels per matmul row (lane-dense 2*Cout)
    wblk = jnp.zeros((2 * K, 2 * Cout), jnp.float32)
    wblk = wblk.at[:K, :Cout].set(w2d)
    wblk = wblk.at[K:, Cout:].set(w2d)
    wblk = wblk.astype(jnp.bfloat16)
    shift2 = jnp.concatenate([shift, shift]).reshape(1, 2 * Cout).astype(jnp.float32)

    # ---- Pallas kernel 1: matmul + BN shift + ReLU ----
    y = _conv_bn_relu(patches, wblk, shift2)                       # (N*H1*W1, Cout) f32
    y = y.reshape(N, H1, W1, Cout)

    # ---- Pallas kernel 2: tiled 3x3/s2/p1 max-pool ----
    out = _maxpool_3x3_s2(y)                                       # (N, H2, W2, Cout)

    # back to NCHW (PyTorch convention)
    return jnp.transpose(out, (0, 3, 1, 2))


# ----------------------------------------------------------------------------
# Pure-JAX reference (for correctness check only)
# ----------------------------------------------------------------------------
def _reference(x, conv_w, conv_b, gamma, beta, run_mean, run_var, eps=1e-5):
    y = jax.lax.conv_general_dilated(
        x, conv_w, window_strides=(2, 2), padding=((3, 3), (3, 3)),
        dimension_numbers=("NCHW", "OIHW", "NCHW"))
    y = y + conv_b[None, :, None, None]
    y = (gamma[None, :, None, None] * (y - run_mean[None, :, None, None])
         / jnp.sqrt(run_var + eps)[None, :, None, None]
         + beta[None, :, None, None])
    y = jnp.maximum(y, 0.0)
    y = jax.lax.reduce_window(
        y, -jnp.inf, jax.lax.max,
        window_dimensions=(1, 1, 3, 3), window_strides=(1, 1, 2, 2),
        padding=((0, 0), (0, 0), (1, 1), (1, 1)))
    return y


if __name__ == "__main__":
    key = jax.random.PRNGKey(0)
    k_x, k_w, k_b, k_g, k_be, k_m, k_v = jax.random.split(key, 7)

    N, Cin, H, W = 2, 3, 16, 16
    Cout = 64

    x = jax.random.normal(k_x, (N, Cin, H, W), dtype=jnp.float32)
    conv_w = 0.05 * jax.random.normal(k_w, (Cout, Cin, 7, 7), dtype=jnp.float32)
    conv_b = 0.05 * jax.random.normal(k_b, (Cout,), dtype=jnp.float32)
    gamma = 1.0 + 0.1 * jax.random.normal(k_g, (Cout,), dtype=jnp.float32)
    beta = 0.1 * jax.random.normal(k_be, (Cout,), dtype=jnp.float32)
    run_mean = 0.05 * jax.random.normal(k_m, (Cout,), dtype=jnp.float32)
    run_var = 1.0 + 0.1 * jnp.abs(jax.random.normal(k_v, (Cout,), dtype=jnp.float32))

    out = imagenet_stem(x, conv_w, conv_b, gamma, beta, run_mean, run_var)
    out = jax.block_until_ready(out)

    ref = _reference(x, conv_w, conv_b, gamma, beta, run_mean, run_var)
    assert out.shape == ref.shape == (N, Cout, 4, 4), (out.shape, ref.shape)
    # bf16 matmul operands (f32 accumulate) -> loosened tolerance vs the f32 reference.
    assert jnp.allclose(out, ref, atol=3e-2, rtol=3e-2), "mismatch vs reference"

    print("KERNEL_OK")
</pallas_src>

<mosaic_0001>
module attributes {stable_mosaic.version = 11 : i64} {
  func.func @_conv_bn_relu_kernel(%arg0: i32, %arg1: memref<64x294xbf16, #tpu.memory_space<vmem>>, %arg2: memref<294x128xbf16, #tpu.memory_space<vmem>>, %arg3: memref<1x128xf32, #tpu.memory_space<vmem>>, %arg4: memref<64x128xf32, #tpu.memory_space<vmem>>) attributes {dimension_semantics = [#tpu.dimension_semantics<parallel>], iteration_bounds = array<i64: 1>, scalar_prefetch = 0 : i64, scratch_operands = 0 : i64, tpu.core_type = #tpu.core_type<tc>, window_params = [{transform_indices = @transform_0, window_bounds = array<i64: 64, 294>}, {pipeline_mode = #tpu.pipeline_mode<synchronous>, transform_indices = @transform_1, window_bounds = array<i64: 294, 128>}, {pipeline_mode = #tpu.pipeline_mode<synchronous>, transform_indices = @transform_2, window_bounds = array<i64: 1, 128>}, {transform_indices = @transform_3, window_bounds = array<i64: 64, 128>}]} {
    %c0 = arith.constant 0 : index
    %c0_0 = arith.constant 0 : index
    %0 = vector.load %arg1[%c0, %c0_0] : memref<64x294xbf16, #tpu.memory_space<vmem>>, vector<64x294xbf16>
    %c0_1 = arith.constant 0 : index
    %c0_2 = arith.constant 0 : index
    %1 = vector.load %arg2[%c0_1, %c0_2] : memref<294x128xbf16, #tpu.memory_space<vmem>>, vector<294x128xbf16>
    %cst = arith.constant dense<0.000000e+00> : vector<64x128xf32>
    %2 = tpu.matmul %0, %1, %cst {dimension_numbers = #tpu.dot_dimension_numbers<[1], [0], [0], [1], [0, 0, 1, 1], [], []>} : vector<64x294xbf16>, vector<294x128xbf16>, vector<64x128xf32> -> vector<64x128xf32>
    %c0_3 = arith.constant 0 : index
    %c0_4 = arith.constant 0 : index
    %3 = vector.load %arg3[%c0_3, %c0_4] : memref<1x128xf32, #tpu.memory_space<vmem>>, vector<1x128xf32>
    %4 = vector.broadcast %3 : vector<1x128xf32> to vector<64x128xf32>
    %5 = arith.addf %2, %4 : vector<64x128xf32>
    %cst_5 = arith.constant 0.000000e+00 : f32
    %6 = vector.broadcast %cst_5 : f32 to vector<64x128xf32>
    %7 = arith.maximumf %5, %6 : vector<64x128xf32>
    %c0_6 = arith.constant 0 : index
    %c0_7 = arith.constant 0 : index
    %8 = vector.load %arg4[%c0_6, %c0_7] : memref<64x128xf32, #tpu.memory_space<vmem>>, vector<64x128xf32>
    tpu.vector_store %arg4[%c0_6, %c0_7], %7 {strides = array<i32>} : memref<64x128xf32, #tpu.memory_space<vmem>>, vector<64x128xf32>,
    return
  }
  func.func @transform_0(%arg0: i32) -> (i32, i32) {
    %c0_i32 = arith.constant 0 : i32
    %c0_i32_0 = arith.constant 0 : i32
    return %arg0, %c0_i32 : i32, i32
  }
  func.func @transform_1(%arg0: i32) -> (i32, i32) {
    %c0_i32 = arith.constant 0 : i32
    %c0_i32_0 = arith.constant 0 : i32
    %c0_i32_1 = arith.constant 0 : i32
    return %c0_i32, %c0_i32_0 : i32, i32
  }
  func.func @transform_2(%arg0: i32) -> (i32, i32) {
    %c0_i32 = arith.constant 0 : i32
    %c0_i32_0 = arith.constant 0 : i32
    %c0_i32_1 = arith.constant 0 : i32
    return %c0_i32, %c0_i32_0 : i32, i32
  }
  func.func @transform_3(%arg0: i32) -> (i32, i32) {
    %c0_i32 = arith.constant 0 : i32
    %c0_i32_0 = arith.constant 0 : i32
    return %arg0, %c0_i32 : i32, i32
  }
}

module attributes {stable_mosaic.version = 11 : i64} {
  func.func @_maxpool_kernel(%arg0: i32, %arg1: i32, %arg2: memref<1x8x5x128xf32, #tpu.memory_space<vmem>>, %arg3: memref<1x1x5x128xf32, #tpu.memory_space<vmem>>, %arg4: memref<1x4x4x64xf32, #tpu.memory_space<vmem>>) attributes {dimension_semantics = [#tpu.dimension_semantics<parallel>, #tpu.dimension_semantics<parallel>], iteration_bounds = array<i64: 2, 1>, scalar_prefetch = 0 : i64, scratch_operands = 0 : i64, tpu.core_type = #tpu.core_type<tc>, window_params = [{transform_indices = @transform_0, window_bounds = array<i64: 1, 8, 5, 128>}, {transform_indices = @transform_1, window_bounds = array<i64: 1, 1, 5, 128>}, {transform_indices = @transform_2, window_bounds = array<i64: 1, 4, 4, 64>}]} {
    %c0 = arith.constant 0 : index
    %c0_0 = arith.constant 0 : index
    %c0_1 = arith.constant 0 : index
    %c0_2 = arith.constant 0 : index
    %0 = vector.load %arg2[%c0, %c0_0, %c0_1, %c0_2] : memref<1x8x5x128xf32, #tpu.memory_space<vmem>>, vector<1x8x5x128xf32>
    %1 = vector.shape_cast %0 : vector<1x8x5x128xf32> to vector<8x5x128xf32>
    %2 = vector.shape_cast %1 : vector<8x5x128xf32> to vector<4x2x5x128xf32>
    %3 = vector.extract_strided_slice %2 {offsets = [0, 0, 0, 0], sizes = [4, 1, 5, 128], strides = [1, 1, 1, 1]} : vector<4x2x5x128xf32> to vector<4x1x5x128xf32>
    %4 = vector.shape_cast %3 : vector<4x1x5x128xf32> to vector<4x5x128xf32>
    %5 = vector.extract_strided_slice %2 {offsets = [0, 1, 0, 0], sizes = [4, 1, 5, 128], strides = [1, 1, 1, 1]} : vector<4x2x5x128xf32> to vector<4x1x5x128xf32>
    %6 = vector.shape_cast %5 : vector<4x1x5x128xf32> to vector<4x5x128xf32>
    %7 = vector.extract_strided_slice %4 {offsets = [1, 0, 0], sizes = [3, 5, 128], strides = [1, 1, 1]} : vector<4x5x128xf32> to vector<3x5x128xf32>
    %c0_3 = arith.constant 0 : index
    %c0_4 = arith.constant 0 : index
    %c0_5 = arith.constant 0 : index
    %c0_6 = arith.constant 0 : index
    %8 = vector.load %arg3[%c0_3, %c0_4, %c0_5, %c0_6] : memref<1x1x5x128xf32, #tpu.memory_space<vmem>>, vector<1x1x5x128xf32>
    %9 = vector.shape_cast %8 : vector<1x1x5x128xf32> to vector<1x5x128xf32>
    %10 = tpu.concatenate %7, %9 in 0 : vector<3x5x128xf32>, vector<1x5x128xf32> -> vector<4x5x128xf32>
    %11 = arith.maximumf %4, %6 : vector<4x5x128xf32>
    %12 = arith.maximumf %11, %10 : vector<4x5x128xf32>
    %13 = vector.extract_strided_slice %12 {offsets = [0, 0, 0], sizes = [4, 4, 64], strides = [1, 1, 1]} : vector<4x5x128xf32> to vector<4x4x64xf32>
    %14 = vector.extract_strided_slice %12 {offsets = [0, 0, 64], sizes = [4, 4, 64], strides = [1, 1, 1]} : vector<4x5x128xf32> to vector<4x4x64xf32>
    %15 = vector.extract_strided_slice %12 {offsets = [0, 1, 0], sizes = [4, 4, 64], strides = [1, 1, 1]} : vector<4x5x128xf32> to vector<4x4x64xf32>
    %16 = arith.maximumf %13, %14 : vector<4x4x64xf32>
    %17 = arith.maximumf %16, %15 : vector<4x4x64xf32>
    %c0_7 = arith.constant 0 : index
    %c0_8 = arith.constant 0 : index
    %c0_9 = arith.constant 0 : index
    %c0_10 = arith.constant 0 : index
    %18 = vector.load %arg4[%c0_7, %c0_8, %c0_9, %c0_10] : memref<1x4x4x64xf32, #tpu.memory_space<vmem>>, vector<1x4x4x64xf32>
    %19 = vector.shape_cast %18 : vector<1x4x4x64xf32> to vector<4x4x64xf32>
    %20 = vector.shape_cast %17 : vector<4x4x64xf32> to vector<1x4x4x64xf32>
    tpu.vector_store %arg4[%c0_7, %c0_8, %c0_9, %c0_10], %20 {strides = array<i32>} : memref<1x4x4x64xf32, #tpu.memory_space<vmem>>, vector<1x4x4x64xf32>,
    return
  }
  func.func @transform_0(%arg0: i32, %arg1: i32) -> (i32, i32, i32, i32) {
    %c0_i32 = arith.constant 0 : i32
    %c0_i32_0 = arith.constant 0 : i32
    %c0_i32_1 = arith.constant 0 : i32
    return %arg0, %arg1, %c0_i32, %c0_i32_0 : i32, i32, i32, i32
  }
  func.func @transform_1(%arg0: i32, %arg1: i32) -> (i32, i32, i32, i32) {
    %c1_i32 = arith.constant 1 : i32
    %0 = arith.addi %arg1, %c1_i32 : i32
    %c8_i32 = arith.constant 8 : i32
    %1 = arith.muli %c8_i32, %0 : i32
    %c0_i32 = arith.constant 0 : i32
    %c0_i32_0 = arith.constant 0 : i32
    %c0_i32_1 = arith.constant 0 : i32
    return %arg0, %1, %c0_i32, %c0_i32_0 : i32, i32, i32, i32
  }
  func.func @transform_2(%arg0: i32, %arg1: i32) -> (i32, i32, i32, i32) {
    %c0_i32 = arith.constant 0 : i32
    %c0_i32_0 = arith.constant 0 : i32
    %c0_i32_1 = arith.constant 0 : i32
    return %arg0, %arg1, %c0_i32, %c0_i32_0 : i32, i32, i32, i32
  }
}

</mosaic_0001>

<llo_original>
// kernel: imagenet_stem.2
$region0: #{imagenet_stem.2}
  #allocation0 [shape = 'u32[]', space=smem, size = 0x4, offset = 0x4, fixed_abs, tag = 'smem constant byte address 0x4 - core index']
  #allocation1 [shape = 'u32[144,128]{1,0:T(1,128)}', space=vmem, size = 0x12000, scoped, tag = 'internal scratch']
  %s0 = inlined_call_operand.vmem [shape: bf16[64,294], index: 0, kind: input, shape index: {}]
  %s1 = inlined_call_operand.vmem [shape: bf16[294,128], index: 1, kind: input, shape index: {}]
  %s2 = inlined_call_operand.vmem [shape: f32[1,128], index: 2, kind: input, shape index: {}]
  %s3 = inlined_call_operand.vmem [shape: f32[64,128], index: 3, kind: output, shape index: {}]
  %s4 = sld [smem:[#allocation0]]
  $region22: #{imagenet_stem.2} parent=0
    _
  %s6 = ssub.s32 1, %s4
  %s7 = scalar_select 0, %s6, %s4
  // Predicated region
  $region2: #{imagenet_stem.2} parent=0 // pred_check
    _
  $region3: #{imagenet_stem.2} parent=0 // pred_check_branch
    %9 = sbr.rel (0) target = $region5
  $region4: #{imagenet_stem.2} parent=0 // pred_region
    _
  $region5: #{imagenet_stem.2} parent=0 // pred_fallthru
    _
  // Predicated region
  $region6: #{imagenet_stem.2} parent=0 // pred_check
    _
  $region7: #{imagenet_stem.2} parent=0 // pred_check_branch
    %11 = sbr.rel (0) target = $region9
  $region8: #{imagenet_stem.2} parent=0 // pred_region
    _
  $region9: #{imagenet_stem.2} parent=0 // pred_fallthru
    _
  // Predicated region
  $region10: #{imagenet_stem.2} parent=0 // pred_check
    _
  $region11: #{imagenet_stem.2} parent=0 // pred_check_branch
    %13 = sbr.rel (0) target = $region13
  $region12: #{imagenet_stem.2} parent=0 // pred_region
    _
  $region13: #{imagenet_stem.2} parent=0 // pred_fallthru
    _
  %v15 = vld [vmem:[%s0] sm:$0xff]
  %v16 = vld [vmem:[%s0 + $0x8] sm:$0xf]
  %v17 = vld [vmem:[%s0 + $0xc] sm:$0xff]
  %v18 = vld [vmem:[%s0 + $0x14] sm:$0xf]
  %v19 = vld [vmem:[%s0 + $0x18] sm:$0xff]
  %v20 = vld [vmem:[%s0 + $0x20] sm:$0xf]
  %v21 = vld [vmem:[%s0 + $0x24] sm:$0xff]
  %v22 = vld [vmem:[%s0 + $0x2c] sm:$0xf]
  %v23 = vld [vmem:[%s0 + $0x30] sm:$0xff]
  %v24 = vld [vmem:[%s0 + $0x38] sm:$0xf]
  %v25 = vld [vmem:[%s0 + $0x3c] sm:$0xff]
  %v26 = vld [vmem:[%s0 + $0x44] sm:$0xf]
  %v27 = vld [vmem:[%s0 + $0x48] sm:$0xff]
  %v28 = vld [vmem:[%s0 + $0x50] sm:$0xf]
  %v29 = vld [vmem:[%s0 + $0x54] sm:$0xff]
  %v30 = vld [vmem:[%s0 + $0x5c] sm:$0xf]
  %v31 = vld [vmem:[%s1] sm:$0xf]
  %v32 = vld [vmem:[%s1 + $0x4] sm:$0xf]
  %v33 = vld [vmem:[%s1 + $0x8] sm:$0xf]
  %v34 = vld [vmem:[%s1 + $0xc] sm:$0xf]
  %v35 = vld [vmem:[%s1 + $0x10] sm:$0xf]
  %v36 = vld [vmem:[%s1 + $0x14] sm:$0xf]
  %v37 = vld [vmem:[%s1 + $0x18] sm:$0xf]
  %v38 = vld [vmem:[%s1 + $0x1c] sm:$0xf]
  %v39 = vld [vmem:[%s1 + $0x20] sm:$0xf]
  %v40 = vld [vmem:[%s1 + $0x24] sm:$0xf]
  %v41 = vld [vmem:[%s1 + $0x28] sm:$0xf]
  %v42 = vld [vmem:[%s1 + $0x2c] sm:$0xf]
  %v43 = vld [vmem:[%s1 + $0x30] sm:$0xf]
  %v44 = vld [vmem:[%s1 + $0x34] sm:$0xf]
  %v45 = vld [vmem:[%s1 + $0x38] sm:$0xf]
  %v46 = vld [vmem:[%s1 + $0x3c] sm:$0xf]
  %v47 = vld [vmem:[%s1 + $0x40] sm:$0xf]
  %v48 = vld [vmem:[%s1 + $0x44] sm:$0xf]
  %v49 = vld [vmem:[%s1 + $0x48] sm:$0xf]
  %v50 = vld [vmem:[%s1 + $0x4c] sm:$0xf]
  %v51 = vld [vmem:[%s1 + $0x50] sm:$0xf]
  %v52 = vld [vmem:[%s1 + $0x54] sm:$0xf]
  %v53 = vld [vmem:[%s1 + $0x58] sm:$0xf]
  %v54 = vld [vmem:[%s1 + $0x5c] sm:$0xf]
  %v55 = vld [vmem:[%s1 + $0x60] sm:$0xf]
  %v56 = vld [vmem:[%s1 + $0x64] sm:$0xf]
  %v57 = vld [vmem:[%s1 + $0x68] sm:$0xf]
  %v58 = vld [vmem:[%s1 + $0x6c] sm:$0xf]
  %v59 = vld [vmem:[%s1 + $0x70] sm:$0xf]
  %v60 = vld [vmem:[%s1 + $0x74] sm:$0xf]
  %v61 = vld [vmem:[%s1 + $0x78] sm:$0xf]
  %v62 = vld [vmem:[%s1 + $0x7c] sm:$0xf]
  %v63 = vld [vmem:[%s1 + $0x80] sm:$0xf]
  %v64 = vld [vmem:[%s1 + $0x84] sm:$0xf]
  %v65 = vld [vmem:[%s1 + $0x88] sm:$0xf]
  %v66 = vld [vmem:[%s1 + $0x8c] sm:$0xf]
  %v67 = vld [vmem:[%s1 + $0x90] sm:$0x7]
  %v68 = vld [vmem:[%s2] sm:$0x1]
  %v70 = vlaneseq
  %v71 = vshrl.u32 %v70, 7
  %v72 = vsub.s32 0, %v71
  %v73 = vrot.slane %v68, %v72
  %v91 = vunpack.c.l.b16 %v15
  %v92 = vunpack.c.h.b16 %v15
  %v93 = vunpack.c.l.b16 %v16
  %v94 = vunpack.c.l.b16 %v17
  %v95 = vunpack.c.h.b16 %v17
  %v96 = vunpack.c.l.b16 %v18
  %v97 = vunpack.c.l.b16 %v19
  %v98 = vunpack.c.h.b16 %v19
  %v99 = vunpack.c.l.b16 %v20
  %v100 = vunpack.c.l.b16 %v21
  %v101 = vunpack.c.h.b16 %v21
  %v102 = vunpack.c.l.b16 %v22
  %v103 = vunpack.c.l.b16 %v23
  %v104 = vunpack.c.h.b16 %v23
  %v105 = vunpack.c.l.b16 %v24
  %v106 = vunpack.c.l.b16 %v25
  %v107 = vunpack.c.h.b16 %v25
  %v108 = vunpack.c.l.b16 %v26
  %v109 = vunpack.c.l.b16 %v27
  %v110 = vunpack.c.h.b16 %v27
  %v111 = vunpack.c.l.b16 %v28
  %v112 = vunpack.c.l.b16 %v29
  %v113 = vunpack.c.h.b16 %v29
  %v114 = vunpack.c.l.b16 %v30
  %v115 = vpack.c.b16 %v94, %v91
  %v116 = vpack.c.b16 %v95, %v92
  %v117 = vpack.c.b16 %v96, %v93
  %v118 = vpack.c.b16 %v100, %v97
  %v119 = vpack.c.b16 %v101, %v98
  %v120 = vpack.c.b16 %v102, %v99
  %v121 = vpack.c.b16 %v106, %v103
  %v122 = vpack.c.b16 %v107, %v104
  %v123 = vpack.c.b16 %v108, %v105
  %v124 = vpack.c.b16 %v112, %v109
  %v125 = vpack.c.b16 %v113, %v110
  %v126 = vpack.c.b16 %v114, %v111
  %v172 = vunpack.c.l.b16 %v31
  %v173 = vunpack.c.l.b16 %v32
  %v174 = vunpack.c.l.b16 %v33
  %v175 = vunpack.c.l.b16 %v34
  %v176 = vunpack.c.l.b16 %v35
  %v177 = vunpack.c.l.b16 %v36
  %v178 = vunpack.c.l.b16 %v37
  %v179 = vunpack.c.l.b16 %v38
  %v180 = vunpack.c.l.b16 %v39
  %v181 = vunpack.c.l.b16 %v40
  %v182 = vunpack.c.l.b16 %v41
  %v183 = vunpack.c.l.b16 %v42
  %v184 = vunpack.c.l.b16 %v43
  %v185 = vunpack.c.l.b16 %v44
  %v186 = vunpack.c.l.b16 %v45
  %v187 = vunpack.c.l.b16 %v46
  %v188 = vunpack.c.l.b16 %v47
  %v189 = vunpack.c.l.b16 %v48
  %v190 = vunpack.c.l.b16 %v49
  %v191 = vunpack.c.l.b16 %v50
  %v192 = vunpack.c.l.b16 %v51
  %v193 = vunpack.c.l.b16 %v52
  %v194 = vunpack.c.l.b16 %v53
  %v195 = vunpack.c.l.b16 %v54
  %v196 = vunpack.c.l.b16 %v55
  %v197 = vunpack.c.l.b16 %v56
  %v198 = vunpack.c.l.b16 %v57
  %v199 = vunpack.c.l.b16 %v58
  %v200 = vunpack.c.l.b16 %v59
  %v201 = vunpack.c.l.b16 %v60
  %v202 = vunpack.c.l.b16 %v61
  %v203 = vunpack.c.l.b16 %v62
  %v204 = vunpack.c.l.b16 %v63
  %v205 = vunpack.c.l.b16 %v64
  %v206 = vunpack.c.l.b16 %v65
  %v207 = vunpack.c.l.b16 %v66
  %v208 = vunpack.c.l.b16 %v67
  %v209 = vpack.c.b16 %v173, %v172
  %v210 = vpack.c.b16 %v175, %v174
  %v211 = vpack.c.b16 %v177, %v176
  %v212 = vpack.c.b16 %v179, %v178
  %v213 = vpack.c.b16 %v181, %v180
  %v214 = vpack.c.b16 %v183, %v182
  %v215 = vpack.c.b16 %v185, %v184
  %v216 = vpack.c.b16 %v187, %v186
  %v217 = vpack.c.b16 %v189, %v188
  %v218 = vpack.c.b16 %v191, %v190
  %v219 = vpack.c.b16 %v193, %v192
  %v220 = vpack.c.b16 %v195, %v194
  %v221 = vpack.c.b16 %v197, %v196
  %v222 = vpack.c.b16 %v199, %v198
  %v223 = vpack.c.b16 %v201, %v200
  %v224 = vpack.c.b16 %v203, %v202
  %v225 = vpack.c.b16 %v205, %v204
  %v226 = vpack.c.b16 %v207, %v206
  %v227 = vpack.c.b16 %v208, %v208
  %vm246 = vcmask 310272
  %v248 = vsel %vm246, %v117, 0
  %v251 = vsel %vm246, %v120, 0
  %v254 = vsel %vm246, %v123, 0
  %v257 = vsel %vm246, %v126, 0
  %vm259 = vcmask 1042432
  %v261 = vsel %vm259, %v227, 0
  %263 = vmatprep.subr.bf16.mxu0 0
  %264 = vmatpush1.bf16.msra.mxu0 %v209
  %265 = vmatprep.subr.bf16.mxu0 0
  %266 = vmatpush1.bf16.msra.mxu0 %v210
  %267 = vmatprep.subr.bf16.mxu0 0
  %268 = vmatpush1.bf16.msra.mxu0 %v211
  %269 = vmatprep.subr.bf16.mxu0 0
  %270 = vmatpush1.bf16.msra.mxu0 %v212
  %271 = vmatprep.subr.bf16.mxu0 0
  %272 = vmatpush1.bf16.msra.mxu0 %v213
  %273 = vmatprep.subr.bf16.mxu0 0
  %274 = vmatpush1.bf16.msra.mxu0 %v214
  %275 = vmatprep.subr.bf16.mxu0 0
  %276 = vmatpush1.bf16.msra.mxu0 %v215
  %277 = vmatprep.subr.bf16.mxu0 0
  %278 = vmatpush1.bf16.msra.mxu0 %v216
  %279 = vmatprep.subr.bf16.mxu0 0
  %280 = vmatpush1.bf16.msra.mxu0 %v217
  %281 = vmatprep.subr.bf16.mxu0 0
  %282 = vmatpush1.bf16.msra.mxu0 %v218
  %283 = vmatprep.subr.bf16.mxu0 0
  %284 = vmatpush1.bf16.msra.mxu0 %v219
  %285 = vmatprep.subr.bf16.mxu0 0
  %286 = vmatpush1.bf16.msra.mxu0 %v220
  %287 = vmatprep.subr.bf16.mxu0 0
  %288 = vmatpush1.bf16.msra.mxu0 %v221
  %289 = vmatprep.subr.bf16.mxu0 0
  %290 = vmatpush1.bf16.msra.mxu0 %v222
  %291 = vmatprep.subr.bf16.mxu0 0
  %292 = vmatpush1.bf16.msra.mxu0 %v223
  %293 = vmatprep.subr.bf16.mxu0 0
  %294 = vmatpush1.bf16.msra.mxu0 %v224
  %295 = vmatprep.mubr.bf16.mxu0 %v116
  %296 = vmatmul.mubr.bf16.gmra.mrb[0].mxu0 %v115
  %v297 = vpop.f32.mrb[0].mxu0
  %v298 = vadd.f32 %v73, %v297
  %v299 = vpop.f32.mrb[0].mxu0
  %v300 = vpop.f32.mrb[0].mxu0
  %v301 = vadd.f32 %v73, %v300
  %v302 = vpop.f32.mrb[0].mxu0
  %303 = vmatprep.mubr.bf16.mxu0 %v119
  %304 = vmatmul.mubr.bf16.gmra.mrb[0].mxu0 %v118
  %v305 = vpop.f32.mrb[0].mxu0
  %v306 = vadd.f32 %v73, %v305
  %v307 = vpop.f32.mrb[0].mxu0
  %v308 = vpop.f32.mrb[0].mxu0
  %v309 = vadd.f32 %v73, %v308
  %v310 = vpop.f32.mrb[0].mxu0
  %311 = vmatprep.mubr.bf16.mxu0 %v122
  %312 = vmatmul.mubr.bf16.gmra.mrb[0].mxu0 %v121
  %v313 = vpop.f32.mrb[0].mxu0
  %v314 = vadd.f32 %v73, %v313
  %v315 = vpop.f32.mrb[0].mxu0
  %v316 = vpop.f32.mrb[0].mxu0
  %v317 = vadd.f32 %v73, %v316
  %v318 = vpop.f32.mrb[0].mxu0
  %319 = vmatprep.mubr.bf16.mxu0 %v125
  %320 = vmatmul.mubr.bf16.gmra.mrb[0].mxu0 %v124
  %v321 = vpop.f32.mrb[0].mxu0
  %v322 = vadd.f32 %v73, %v321
  %v323 = vpop.f32.mrb[0].mxu0
  %v324 = vpop.f32.mrb[0].mxu0
  %v325 = vadd.f32 %v73, %v324
  %v326 = vpop.f32.mrb[0].mxu0
  %327 = vdwg.mxu0
  %328 = vmatprep.subr.bf16.mxu0 0
  %329 = vmatpush1.bf16.msra.mxu0 %v225
  %330 = vmatprep.subr.bf16.mxu0 0
  %331 = vmatpush1.bf16.msra.mxu0 %v226
  %332 = vmatprep.subr.bf16.mxu0 0
  %333 = vmatpush1.bf16.msra.mxu0 %v261
  %334 = vmatprep.subr.bf16.mxu0 0
  %335 = vmatpush1.bf16.msra.mxu0 0
  %336 = vmatprep.subr.bf16.mxu0 0
  %337 = vmatpush1.bf16.msra.mxu0 0
  %338 = vmatprep.subr.bf16.mxu0 0
  %339 = vmatpush1.bf16.msra.mxu0 0
  %340 = vmatprep.subr.bf16.mxu0 0
  %341 = vmatpush1.bf16.msra.mxu0 0
  %342 = vmatprep.subr.bf16.mxu0 0
  %343 = vmatpush1.bf16.msra.mxu0 0
  %344 = vmatprep.subr.bf16.mxu0 0
  %345 = vmatpush1.bf16.msra.mxu0 0
  %346 = vmatprep.subr.bf16.mxu0 0
  %347 = vmatpush1.bf16.msra.mxu0 0
  %348 = vmatprep.subr.bf16.mxu0 0
  %349 = vmatpush1.bf16.msra.mxu0 0
  %350 = vmatprep.subr.bf16.mxu0 0
  %351 = vmatpush1.bf16.msra.mxu0 0
  %352 = vmatprep.subr.bf16.mxu0 0
  %353 = vmatpush1.bf16.msra.mxu0 0
  %354 = vmatprep.subr.bf16.mxu0 0
  %355 = vmatpush1.bf16.msra.mxu0 0
  %356 = vmatprep.subr.bf16.mxu0 0
  %357 = vmatpush1.bf16.msra.mxu0 0
  %358 = vmatprep.subr.bf16.mxu0 0
  %359 = vmatpush1.bf16.msra.mxu0 0
  %360 = vmatprep.mubr.bf16.mxu0 0
  %361 = vmatmul.mubr.bf16.gmra.mrb[0].mxu0 %v248
  %v362 = vpop.f32.mrb[0].mxu0
  %v363 = vadd.f32 %v298, %v362
  %v364 = vpop.f32.mrb[0].mxu0
  %v365 = vpop.f32.mrb[0].mxu0
  %v366 = vadd.f32 %v301, %v365
  %v367 = vpop.f32.mrb[0].mxu0
  %368 = vmatprep.mubr.bf16.mxu0 0
  %369 = vmatmul.mubr.bf16.gmra.mrb[0].mxu0 %v251
  %v370 = vpop.f32.mrb[0].mxu0
  %v371 = vadd.f32 %v306, %v370
  %v372 = vpop.f32.mrb[0].mxu0
  %v373 = vpop.f32.mrb[0].mxu0
  %v374 = vadd.f32 %v309, %v373
  %v375 = vpop.f32.mrb[0].mxu0
  %376 = vmatprep.mubr.bf16.mxu0 0
  %377 = vmatmul.mubr.bf16.gmra.mrb[0].mxu0 %v254
  %v378 = vpop.f32.mrb[0].mxu0
  %v379 = vadd.f32 %v314, %v378
  %v380 = vpop.f32.mrb[0].mxu0
  %v381 = vpop.f32.mrb[0].mxu0
  %v382 = vadd.f32 %v317, %v381
  %v383 = vpop.f32.mrb[0].mxu0
  %384 = vmatprep.mubr.bf16.mxu0 0
  %385 = vmatmul.mubr.bf16.gmra.mrb[0].mxu0 %v257
  %v386 = vpop.f32.mrb[0].mxu0
  %v387 = vadd.f32 %v322, %v386
  %v388 = vpop.f32.mrb[0].mxu0
  %v389 = vpop.f32.mrb[0].mxu0
  %v390 = vadd.f32 %v325, %v389
  %v391 = vpop.f32.mrb[0].mxu0
  %392 = vdwg.mxu0
  %v393 = vmax.f32 %v363, 0.0
  %v394 = vmax.f32 %v366, 0.0
  %v395 = vmax.f32 %v371, 0.0
  %v396 = vmax.f32 %v374, 0.0
  %v397 = vmax.f32 %v379, 0.0
  %v398 = vmax.f32 %v382, 0.0
  %v399 = vmax.f32 %v387, 0.0
  %v400 = vmax.f32 %v390, 0.0
  %401 = vst [vmem:[%s3] sm:$0xff] %v393
  %402 = vst [vmem:[%s3 + $0x8] sm:$0xff] %v394
  %403 = vst [vmem:[%s3 + $0x10] sm:$0xff] %v395
  %404 = vst [vmem:[%s3 + $0x18] sm:$0xff] %v396
  %405 = vst [vmem:[%s3 + $0x20] sm:$0xff] %v397
  %406 = vst [vmem:[%s3 + $0x28] sm:$0xff] %v398
  %407 = vst [vmem:[%s3 + $0x30] sm:$0xff] %v399
  %408 = vst [vmem:[%s3 + $0x38] sm:$0xff] %v400
  // Predicated region
  $region14: #{imagenet_stem.2} parent=0 // pred_check
    _
  $region15: #{imagenet_stem.2} parent=0 // pred_check_branch
    %410 = sbr.rel (0) target = $region17
  $region16: #{imagenet_stem.2} parent=0 // pred_region
    _
  $region17: #{imagenet_stem.2} parent=0 // pred_fallthru
    _
  // Predicated region
  $region18: #{imagenet_stem.2} parent=0 // pred_check
    _
  $region19: #{imagenet_stem.2} parent=0 // pred_check_branch
    %412 = sbr.rel (0) target = $region21
  $region20: #{imagenet_stem.2} parent=0 // pred_region
    _
  $region21: #{imagenet_stem.2} parent=0 // pred_fallthru
    _

// kernel: imagenet_stem.3
$region0: #{imagenet_stem.3}
  #allocation0 [shape = 'u32[]', space=smem, size = 0x4, offset = 0x4, fixed_abs, tag = 'smem constant byte address 0x4 - core index']
  #allocation1 [shape = 'u32[144,128]{1,0:T(1,128)}', space=vmem, size = 0x12000, scoped, tag = 'internal scratch']
  %s0 = inlined_call_operand.vmem [shape: f32[2,10,5,128], index: 0, kind: input, shape index: {}, may-alias: {0,1}]
  %s1 = inlined_call_operand.vmem [shape: f32[2,10,5,128], index: 1, kind: input, shape index: {}, may-alias: {0,1}]
  %s2 = inlined_call_operand.hbm [shape: f32[2,4,4,64], index: 2, kind: output, shape index: {}]
  %s3 = sld [smem:[#allocation0]]
  $region41: #{imagenet_stem.3} parent=0
    _
  %s5 = ssub.s32 1, %s3
  %s6 = scalar_select 0, %s5, %s3
  $region1: #{imagenet_stem.3} parent=0
    #allocation2 [shape = 'u8[16384]{0}', space=vmem, size = 0x4000, scoped, tag = 'output window, operand 0']
    #allocation3 [shape = 's32[2]{0}', space=sflag, size = 0x8, scoped, tag = 'scoped memory for imagenet_stem.3']
    %7 = vsyncpa [#allocation3], 0
    %s8 = scalar_lea.sflag [#allocation3], 1
    %9 = vsyncpa %s8, 0
    loop: start=0, step=1, limit=4
    $region2: #{imagenet_stem.3} parent=1 // loop_pre_header
      _
    $region3: #{imagenet_stem.3} parent=1 // loop_header
      %s11 = sphi 0, %s15
      %p12 = scmp.ge.s32.totalorder %s11, 4
      %s18 = sphi 0, %s30
      %s19 = sphi 0, %s26
      %s20 = sphi 0, %s18
      %s21 = sphi 0, %s19
      %s22 = sphi 0, %s20
      %s23 = sphi 0, %s21
      %s35 = sphi 0, %s37
      %s38 = sphi 0, %s35
      %s39 = sphi 0, %s38
      %s55 = sphi 0, %s39
      %s67 = sphi 0, %s69
      %s70 = sphi 0, %s67
      %s71 = sphi 0, %s70
      %s87 = sphi 0, %s71
      %s95 = sphi 0, %s97
      %s98 = sphi 0, %s95
      %s99 = sphi 0, %s98
      %s115 = sphi 0, %s99
    $region4: #{imagenet_stem.3} parent=1 // loop_header_branch
      %14 = sbr.rel (%p12) target = $region8
    $region5: #{imagenet_stem.3} parent=1 // loop_body
      %s16 = ssub.s32 %s11, 1
      %s17 = ssub.s32 %s11, 2
      %s24 = sadd.s32 1, %s19
      %p25 = scmp.ge.s32.totalorder %s24, 1
      %s26 = scalar_select %p25, 0, %s24
      %s27 = sadd.s32 1, %s18
      %s28 = scalar_select %p25, %s27, %s18
      %p29 = scmp.ge.s32.totalorder %s28, 2
      %s30 = scalar_select %p29, 0, %s28
      %s31 = ssub.s32 %s18, %s30
      %s32 = ssub.s32 %s19, %s26
      %s33 = sor.u32 %s31, %s32
      %p34 = scmp.eq.s32.totalorder %s33, 0
      %s36 = sadd.s32 %s35, 1
      %s37 = scalar_select %p34, %s35, %s36
      %p40 = pneg %p34
      %p41 = scmp.eq.s32.totalorder %s11, 1
      %p42 = por %p40, %p41
      %p43 = scmp.ne.s32.totalorder %s35, %s38
      %p44 = scmp.eq.s32.totalorder %s11, 0
      %p45 = por %p43, %p44
      %p46 = scmp.ne.s32.totalorder %s35, %s38
      %p47 = scmp.eq.s32.totalorder %s16, 1
      %p48 = por %p46, %p47
      %p49 = scmp.ne.s32.totalorder %s38, %s39
      %p50 = scmp.eq.s32.totalorder %s16, 0
      %p51 = por %p49, %p50
      %p52 = scmp.ne.s32.totalorder %s38, %s39
      %p53 = scmp.eq.s32.totalorder %s17, 1
      %p54 = por %p52, %p53
      %p56 = scmp.ne.s32.totalorder %s39, %s55
      %p57 = scmp.eq.s32.totalorder %s17, 0
      %p58 = por %p56, %p57
      %s59 = sadd.s32 %s19, 1
      %s60 = smul.u32 %s59, 8
      %s61 = sadd.s32 %s26, 1
      %s62 = smul.u32 %s61, 8
      %s63 = ssub.s32 %s18, %s30
      %s64 = ssub.s32 %s60, %s62
      %s65 = sor.u32 %s63, %s64
      %p66 = scmp.eq.s32.totalorder %s65, 0
      %s68 = sadd.s32 %s67, 1
      %s69 = scalar_select %p66, %s67, %s68
      %p72 = pneg %p66
      %p73 = scmp.eq.s32.totalorder %s11, 1
      %p74 = por %p72, %p73
      %p75 = scmp.ne.s32.totalorder %s67, %s70
      %p76 = scmp.eq.s32.totalorder %s11, 0
      %p77 = por %p75, %p76
      %p78 = scmp.ne.s32.totalorder %s67, %s70
      %p79 = scmp.eq.s32.totalorder %s16, 1
      %p80 = por %p78, %p79
      %p81 = scmp.ne.s32.totalorder %s70, %s71
      %p82 = scmp.eq.s32.totalorder %s16, 0
      %p83 = por %p81, %p82
      %p84 = scmp.ne.s32.totalorder %s70, %s71
      %p85 = scmp.eq.s32.totalorder %s17, 1
      %p86 = por %p84, %p85
      %p88 = scmp.ne.s32.totalorder %s71, %s87
      %p89 = scmp.eq.s32.totalorder %s17, 0
      %p90 = por %p88, %p89
      %s91 = ssub.s32 %s18, %s30
      %s92 = ssub.s32 %s19, %s26
      %s93 = sor.u32 %s91, %s92
      %p94 = scmp.eq.s32.totalorder %s93, 0
      %s96 = sadd.s32 %s95, 1
      %s97 = scalar_select %p94, %s95, %s96
      %p100 = pneg %p94
      %p101 = scmp.eq.s32.totalorder %s11, 1
      %p102 = por %p100, %p101
      %p103 = scmp.ne.s32.totalorder %s95, %s98
      %p104 = scmp.eq.s32.totalorder %s11, 0
      %p105 = por %p103, %p104
      %p106 = scmp.ne.s32.totalorder %s95, %s98
      %p107 = scmp.eq.s32.totalorder %s16, 1
      %p108 = por %p106, %p107
      %p109 = scmp.ne.s32.totalorder %s98, %s99
      %p110 = scmp.eq.s32.totalorder %s16, 0
      %p111 = por %p109, %p110
      %p112 = scmp.ne.s32.totalorder %s98, %s99
      %p113 = scmp.eq.s32.totalorder %s17, 1
      %p114 = por %p112, %p113
      %p116 = scmp.ne.s32.totalorder %s99, %s115
      %p117 = scmp.eq.s32.totalorder %s17, 0
      %p118 = por %p116, %p117
      %p119 = scmp.le.s32.totalorder 1, %s11
      %p120 = scmp.lt.s32.totalorder %s11, 3
      %p121 = pnand %p119, %p120
      %p122 = pneg %p121
      // Predicated region
      $region9: #{imagenet_stem.3} parent=5 // pred_check
        _
      $region10: #{imagenet_stem.3} parent=5 // pred_check_branch
        %124 = sbr.rel (%p121) target = $region12
      $region11: #{imagenet_stem.3} parent=5 // pred_region
        %s125 = ssub.s32 %s11, 1
      $region12: #{imagenet_stem.3} parent=5 // pred_fallthru
        _
      %p126 = scmp.lt.s32.totalorder %s11, 2
      // Predicated region
      $region13: #{imagenet_stem.3} parent=5 // pred_check
        %p127 = pneg %p126
      $region14: #{imagenet_stem.3} parent=5 // pred_check_branch
        %129 = sbr.rel (%p127) target = $region16
      $region15: #{imagenet_stem.3} parent=5 // pred_region
        // Predicated region
        $region17: #{imagenet_stem.3} parent=15 // pred_check
          %p130 = pneg %p45
        $region18: #{imagenet_stem.3} parent=15 // pred_check_branch
          %132 = sbr.rel (%p130) target = $region20
        $region19: #{imagenet_stem.3} parent=15 // pred_region
          %s133 = smul.u32 8, %s19
          %s134 = ssub.s32 10, %s133
          %p135 = scmp.lt.s32.totalorder %s134, 8
          %s136 = scalar_select %p135, %s134, 8
          %s137 = smul.u32 128, %s136
          %p138 = scmp.lt.s32.totalorder %s18, 1
          %s139 = scalar_select %p138, %s18, 1
          %p140 = scmp.lt.s32.totalorder %s133, 9
          %s141 = scalar_select %p140, %s133, 9
          %s142 = smul.addr %s139, 10
          %s143 = sadd.s32 %s141, %s142
          %s144 = smul.addr %s143, 8
          %s145 = scalar_lea.vmem %s0, %s144
          %s146 = smul.u32 8, %s19
          %s147 = ssub.s32 10, %s146
          %p148 = scmp.lt.s32.totalorder %s147, 8
          %s149 = scalar_select %p148, %s147, 8
          %s150 = smul.u32 128, %s149
        $region20: #{imagenet_stem.3} parent=15 // pred_fallthru
          _
        // Predicated region
        $region21: #{imagenet_stem.3} parent=15 // pred_check
          %p151 = pneg %p77
        $region22: #{imagenet_stem.3} parent=15 // pred_check_branch
          %153 = sbr.rel (%p151) target = $region24
        $region23: #{imagenet_stem.3} parent=15 // pred_region
          %s154 = sadd.s32 %s19, 1
          %s155 = smul.u32 %s154, 8
          %p156 = scmp.lt.s32.totalorder %s18, 1
          %s157 = scalar_select %p156, %s18, 1
          %p158 = scmp.lt.s32.totalorder %s155, 9
          %s159 = scalar_select %p158, %s155, 9
          %s160 = smul.addr %s157, 10
          %s161 = sadd.s32 %s159, %s160
          %s162 = smul.addr %s161, 8
          %s163 = scalar_lea.vmem %s1, %s162
          %s164 = sadd.s32 %s19, 1
          %s165 = smul.u32 %s164, 8
        $region24: #{imagenet_stem.3} parent=15 // pred_fallthru
          _
      $region16: #{imagenet_stem.3} parent=5 // pred_fallthru
        _
      %p166 = scmp.le.s32.totalorder 1, %s11
      %p167 = scmp.lt.s32.totalorder %s11, 3
      %p168 = pnand %p166, %p167
      %p169 = pneg %p168
      // Predicated region
      $region25: #{imagenet_stem.3} parent=5 // pred_check
        _
      $region26: #{imagenet_stem.3} parent=5 // pred_check_branch
        %171 = sbr.rel (%p168) target = $region28
      $region27: #{imagenet_stem.3} parent=5 // pred_region
        %s172 = ssub.s32 %s11, 1
        %s173 = smul.u32 8, %s21
        %s174 = ssub.s32 10, %s173
        %p175 = scmp.lt.s32.totalorder %s174, 8
        %s176 = scalar_select %p175, %s174, 8
        %s177 = smul.u32 128, %s176
        %p178 = scmp.lt.s32.totalorder %s20, 1
        %s179 = scalar_select %p178, %s20, 1
        %p180 = scmp.lt.s32.totalorder %s173, 9
        %s181 = scalar_select %p180, %s173, 9
        %s182 = smul.addr %s179, 10
        %s183 = sadd.s32 %s181, %s182
        %s184 = smul.addr %s183, 8
        %s185 = scalar_lea.vmem %s0, %s184
        %p186 = pneg %p51
        %p187 = pneg %p48
        %s188 = sadd.s32 %s21, 1
        %s189 = smul.u32 %s188, 8
        %p190 = scmp.lt.s32.totalorder %s20, 1
        %s191 = scalar_select %p190, %s20, 1
        %p192 = scmp.lt.s32.totalorder %s189, 9
        %s193 = scalar_select %p192, %s189, 9
        %s194 = smul.addr %s191, 10
        %s195 = sadd.s32 %s193, %s194
        %s196 = smul.addr %s195, 8
        %s197 = scalar_lea.vmem %s1, %s196
        %p198 = pneg %p83
        %p199 = pneg %p80
        %p200 = pneg %p111
        %p201 = pneg %p108
        %s202 = sand.u32 %s98, 1
        %s203 = scalar_lea.sflag [#allocation3], %s202
        %s204 = sand.u32 %s98, 1
        %s205 = smul.addr %s204, 16
        %s206 = scalar_lea.vmem [#allocation2], %s205
        %s207 = smul.u32 8, %s21
        %s208 = ssub.s32 10, %s207
        %p209 = scmp.lt.s32.totalorder %s208, 8
        %s210 = scalar_select %p209, %s208, 8
        %s211 = smul.u32 128, %s210
        %p212 = scmp.lt.s32.totalorder %s20, 1
        %s213 = scalar_select %p212, %s20, 1
        %p214 = scmp.lt.s32.totalorder %s207, 9
        %s215 = scalar_select %p214, %s207, 9
        %s216 = smul.addr %s213, 10
        %s217 = sadd.s32 %s215, %s216
        %s218 = smul.addr %s217, 8
        %s219 = scalar_lea.vmem %s0, %s218
        %s220 = smul.u32 8, %s21
        %s221 = ssub.s32 10, %s220
        %p222 = scmp.lt.s32.totalorder %s221, 8
        %s223 = scalar_select %p222, %s221, 8
        %s224 = smul.u32 128, %s223
        %s225 = sadd.s32 %s21, 1
        %s226 = smul.u32 %s225, 8
        %p227 = scmp.lt.s32.totalorder %s20, 1
        %s228 = scalar_select %p227, %s20, 1
        %p229 = scmp.lt.s32.totalorder %s226, 9
        %s230 = scalar_select %p229, %s226, 9
        %s231 = smul.addr %s228, 10
        %s232 = sadd.s32 %s230, %s231
        %s233 = smul.addr %s232, 8
        %s234 = scalar_lea.vmem %s1, %s233
        %s235 = sadd.s32 %s21, 1
        %s236 = smul.u32 %s235, 8
        %s237 = smul.u32 4, %s21
        %v238 = vld [vmem:[%s219] sm:$0x1f]
        %v239 = vld [vmem:[%s219 + $0x8] sm:$0x1f]
        %v240 = vld [vmem:[%s219 + $0x10] sm:$0x1f]
        %v241 = vld [vmem:[%s219 + $0x18] sm:$0x1f]
        %v242 = vld [vmem:[%s219 + $0x20] sm:$0x1f]
        %v243 = vld [vmem:[%s219 + $0x28] sm:$0x1f]
        %v244 = vld [vmem:[%s219 + $0x30] sm:$0x1f]
        %v245 = vld [vmem:[%s219 + $0x38] sm:$0x1f]
        %v246 = vld [vmem:[%s234] sm:$0x1f]
        %v247 = vmax.f32 %v238, %v239
        %v248 = vmax.f32 %v240, %v241
        %v249 = vmax.f32 %v242, %v243
        %v250 = vmax.f32 %v244, %v245
        %v251 = vmax.f32 %v247, %v240
        %v252 = vmax.f32 %v248, %v242
        %v253 = vmax.f32 %v249, %v244
        %v254 = vmax.f32 %v250, %v246
        %259 = vrot.lane.b32.xlu0 %v251, 64
        %v260 = vpop.permute.xlu0 %259
        %261 = vrot.lane.b32.xlu0 %v252, 64
        %v262 = vpop.permute.xlu0 %261
        %263 = vrot.lane.b32.xlu0 %v253, 64
        %v264 = vpop.permute.xlu0 %263
        %265 = vrot.lane.b32.xlu0 %v254, 64
        %v266 = vpop.permute.xlu0 %265
        %v271 = vmax.f32 %v251, %v260
        %v272 = vmax.f32 %v252, %v262
        %v273 = vmax.f32 %v253, %v264
        %v274 = vmax.f32 %v254, %v266
        %v275 = vrot.slane %v251, 1
        %v276 = vrot.slane %v252, 1
        %v277 = vrot.slane %v253, 1
        %v278 = vrot.slane %v254, 1
        %v283 = vmax.f32 %v271, %v275
        %v284 = vmax.f32 %v272, %v276
        %v285 = vmax.f32 %v273, %v277
        %v286 = vmax.f32 %v274, %v278
        %vm287 = vcmask 519168
        %288 = vst.msk [vmem:[%s206] sm:$0xf] %vm287, %v283
        %289 = vst.msk [vmem:[%s206 + $0x4] sm:$0xf] %vm287, %v284
        %290 = vst.msk [vmem:[%s206 + $0x8] sm:$0xf] %vm287, %v285
        %291 = vst.msk [vmem:[%s206 + $0xc] sm:$0xf] %vm287, %v286
        %s292 = sand.u32 %s98, 1
        %s293 = scalar_lea.sflag [#allocation3], %s292
        %s294 = sand.u32 %s98, 1
        %s295 = smul.addr %s294, 16
        %s296 = scalar_lea.vmem [#allocation2], %s295
        // Predicated region
        $region29: #{imagenet_stem.3} parent=27 // pred_check
          %p297 = pneg %p108
        $region30: #{imagenet_stem.3} parent=27 // pred_check_branch
          %299 = sbr.rel (%p297) target = $region32
        $region31: #{imagenet_stem.3} parent=27 // pred_region
          %s300 = smul.u32 4, %s21
          %s302 = ssub.s32 256, 256
          %303 = vsyncadd %s293, %s302
          %s304 = smul.addr %s20, 4
          %s305 = sadd.s32 %s300, %s304
          %s306 = smul.addr %s305, 64
          %s307 = scalar_lea.hbm %s2, %s306
          %s308 = sshll.u32 %s296, 4
          %s309 = int_to_ptr.vmem [resolvable:$true] %s308
          %314 = dma.vmem_to_hbm [thread:$0]  %s309, 256, %s307, %s293, 64, 64, 4
        $region32: #{imagenet_stem.3} parent=27 // pred_fallthru
          _
      $region28: #{imagenet_stem.3} parent=5 // pred_fallthru
        _
      %p315 = scmp.le.s32.totalorder 2, %s11
      // Predicated region
      $region33: #{imagenet_stem.3} parent=5 // pred_check
        %p316 = pneg %p315
      $region34: #{imagenet_stem.3} parent=5 // pred_check_branch
        %318 = sbr.rel (%p316) target = $region36
      $region35: #{imagenet_stem.3} parent=5 // pred_region
        %s319 = ssub.s32 %s11, 2
        // Predicated region
        $region37: #{imagenet_stem.3} parent=35 // pred_check
          %p320 = pneg %p114
        $region38: #{imagenet_stem.3} parent=35 // pred_check_branch
          %322 = sbr.rel (%p320) target = $region40
        $region39: #{imagenet_stem.3} parent=35 // pred_region
          %s323 = sand.u32 %s99, 1
          %s324 = scalar_lea.sflag [#allocation3], %s323
          %s325 = sand.u32 %s99, 1
          %s326 = smul.addr %s325, 16
          %s327 = scalar_lea.vmem [#allocation2], %s326
          %328 = dma.done %s324, 256
        $region40: #{imagenet_stem.3} parent=35 // pred_fallthru
          _
      $region36: #{imagenet_stem.3} parent=5 // pred_fallthru
        _
    $region6: #{imagenet_stem.3} parent=1 // loop_footer
      %s15 = sadd.s32 1, %s11
    $region7: #{imagenet_stem.3} parent=1 // loop_footer_branch
      %10 = sbr.rel target = $region3
    $region8: #{imagenet_stem.3} parent=1 // loop_exit
      _
    %329 = vsyncpa [#allocation3], 1
    %s330 = scalar_lea.sflag [#allocation3], 1
    %331 = vsyncpa %s330, 1

</llo_original>
